<compile_context>
chip_gen: v6e
topology: v6e:2x2x1
jax: 0.10.0
libtpu: 0.0.40
codegen_flags: <defaults>
</compile_context>

<pallas_src>
import jax
import jax.numpy as jnp
from jax.experimental import pallas as pl
from jax.experimental.pallas import tpu as pltpu


def _sigmoid_kernel(logit_ref, out_ref):
    x = logit_ref[...]                                   # (1, 1) f32 in VMEM
    # sigmoid(x) = 1 / (1 + exp(-x)); exp -> EUP, reciprocal (approx) -> EUP.
    out_ref[...] = pl.reciprocal(1.0 + jnp.exp(-x), approx=True)


def dummy_fusion_net_forward(lambda_logit_2d: jax.Array) -> jax.Array:
    """Pallas equivalent of DummyFusionNet.forward().

    Args:
      lambda_logit_2d: (1, 1) float32 parameter (scalar stored lane-aligned).
    Returns:
      (1, 1) float32 = sigmoid(lambda_logit). Squeeze outside the jit boundary.
    """
    return pl.pallas_call(
        _sigmoid_kernel,
        out_shape=jax.ShapeDtypeStruct((1, 1), jnp.float32),
        in_specs=[pl.BlockSpec((1, 1), lambda: (0, 0),
                               memory_space=pltpu.VMEM)],
        out_specs=pl.BlockSpec((1, 1), lambda: (0, 0),
                               memory_space=pltpu.VMEM),
    )(lambda_logit_2d)


if __name__ == "__main__":
    # The module's forward() takes no inputs; its only state is the parameter
    # lambda_logit, deterministically initialized to 0.0 exactly as in
    # __init__. (PRNGKey(0) created for harness consistency; no random inputs
    # are required by this module.)
    _ = jax.random.PRNGKey(0)

    # Parameter stored directly as (1, 1) f32 so the forward pass needs no
    # reshape/astype around the kernel call.
    lambda_logit = jnp.zeros((1, 1), dtype=jnp.float32)

    out = dummy_fusion_net_forward(lambda_logit)
    out = jax.block_until_ready(out)

    # Squeeze to the 0-d scalar (matching torch's 0-d tensor) OUTSIDE the
    # traced/kernel region.
    result = float(out[0, 0])

    expected = 0.5  # sigmoid(0.0)
    assert out.shape == (1, 1), f"expected (1, 1) output, got {out.shape}"
    # approx reciprocal of 2.0 is exact on the EUP, but allow a small tolerance.
    assert abs(result - expected) < 1e-3, result
    print("KERNEL_OK")
</pallas_src>

<mosaic_0001>
module attributes {stable_mosaic.version = 11 : i64} {
  func.func @_sigmoid_kernel(%arg0: memref<1x1xf32, #tpu.memory_space<vmem>>, %arg1: memref<1x1xf32, #tpu.memory_space<vmem>>) attributes {dimension_semantics = [], scalar_prefetch = 0 : i64, scratch_operands = 0 : i64, tpu.core_type = #tpu.core_type<tc>} {
    %c0 = arith.constant 0 : index
    %c0_0 = arith.constant 0 : index
    %0 = vector.load %arg0[%c0, %c0_0] : memref<1x1xf32, #tpu.memory_space<vmem>>, vector<1x1xf32>
    %cst = arith.constant 0.000000e+00 : f32
    %1 = vector.broadcast %cst : f32 to vector<1x1xf32>
    %2 = arith.subf %1, %0 : vector<1x1xf32>
    %3 = math.exp %2 : vector<1x1xf32>
    %cst_1 = arith.constant 1.000000e+00 : f32
    %4 = vector.broadcast %cst_1 : f32 to vector<1x1xf32>
    %5 = arith.addf %4, %3 : vector<1x1xf32>
    %6 = tpu.reciprocal %5 {approx = true} : vector<1x1xf32> -> vector<1x1xf32>
    %c0_2 = arith.constant 0 : index
    %c0_3 = arith.constant 0 : index
    %7 = vector.load %arg1[%c0_2, %c0_3] : memref<1x1xf32, #tpu.memory_space<vmem>>, vector<1x1xf32>
    tpu.vector_store %arg1[%c0_2, %c0_3], %6 {strides = array<i32>} : memref<1x1xf32, #tpu.memory_space<vmem>>, vector<1x1xf32>,
    return
  }
}

</mosaic_0001>

<llo_original>
// kernel: tpu_custom_call.1
$region0: #{tpu_custom_call.1}
  #allocation0 [shape = 'u32[]', space=smem, size = 0x4, offset = 0x4, fixed_abs, tag = 'smem constant byte address 0x4 - core index']
  #allocation1 [shape = 'u32[144,128]{1,0:T(1,128)}', space=vmem, size = 0x12000, scoped, tag = 'internal scratch']
  #allocation2 [shape = 'f32[1,1]{1,0:T(1,128)S(1)}', space=vmem, size = 0x200, scoped, tag = 'scoped memory for tpu_custom_call.1']
  %s0 = inlined_call_operand.<no memory space> [shape: f32[1,1], index: 0, kind: input, shape index: {}]
  %s1 = inlined_call_operand.hbm [shape: f32[1,1], index: 1, kind: output, shape index: {}]
  %s2 = sld [smem:[#allocation0]]
  $region14: #{tpu_custom_call.1} parent=0
    _
  %s4 = ssub.s32 1, %s2
  %s5 = scalar_select 0, %s4, %s2
  %v6 = vstv %s0
  %7 = vst [vmem:[#allocation2] sm:$0x1] %v6
  $region1: #{tpu_custom_call.1} parent=0
    #allocation3 [shape = 'u8[512]{0}', space=vmem, size = 0x400, scoped, tag = 'output window, operand 0, single buffered']
    #allocation4 [shape = 's32[1]{0}', space=sflag, size = 0x4, scoped, tag = 'scoped memory for tpu_custom_call.1']
    %8 = vsyncpa [#allocation4], 0
    // Predicated region
    $region2: #{tpu_custom_call.1} parent=1 // pred_check
      _
    $region3: #{tpu_custom_call.1} parent=1 // pred_check_branch
      %10 = sbr.rel (0) target = $region5
    $region4: #{tpu_custom_call.1} parent=1 // pred_region
      _
    $region5: #{tpu_custom_call.1} parent=1 // pred_fallthru
      _
    %v11 = vld [vmem:[#allocation2] sm:$0x1]
    %v12 = vsub.f32 0.0, %v11
    %v13 = vmul.f32 %v12, 1.442695
    %v14 = vpow.pop %v13
    %v15 = vadd.f32 %v14, 1.0
    %v16 = vrcp.pop %v15
    %vm17 = vcmask 0
    %18 = vst.msk [vmem:[#allocation3] sm:$0x1] %vm17, %v16
    // Predicated region
    $region6: #{tpu_custom_call.1} parent=1 // pred_check
      _
    $region7: #{tpu_custom_call.1} parent=1 // pred_check_branch
      %20 = sbr.rel (0) target = $region9
    $region8: #{tpu_custom_call.1} parent=1 // pred_region
      %s22 = ssub.s32 16, 16
      %23 = vsyncadd [#allocation4], %s22
      %s25 = sshll.u32 [#allocation3], 4
      %s26 = int_to_ptr.vmem [resolvable:$true] %s25
      %28 = dma.vmem_to_hbm [thread:$0]  %s26, 16, %s1, [#allocation4]
    $region9: #{tpu_custom_call.1} parent=1 // pred_fallthru
      _
    // Predicated region
    $region10: #{tpu_custom_call.1} parent=1 // pred_check
      _
    $region11: #{tpu_custom_call.1} parent=1 // pred_check_branch
      %30 = sbr.rel (0) target = $region13
    $region12: #{tpu_custom_call.1} parent=1 // pred_region
      %31 = dma.done [#allocation4], 16
    $region13: #{tpu_custom_call.1} parent=1 // pred_fallthru
      _
    %32 = vsyncpa [#allocation4], 1

</llo_original>
